<compile_context>
chip_gen: v7x
topology: tpu7x:2x2x1
jax: 0.10.0
libtpu: 0.0.40
codegen_flags: <defaults>
</compile_context>

<pallas_src>
import functools

import jax
import jax.numpy as jnp
from jax.experimental import pallas as pl
from jax.experimental.pallas import tpu as pltpu


def _round_up(v, m):
    return ((v + m - 1) // m) * m


def _dueling_kernel(x_ref,
                    w1_ref, b1_ref,
                    w2_ref, b2_ref,
                    wh_ref, bh_ref,
                    wo_ref, bo_ref,
                    q_ref,
                    *, action_dim):
    """Fully fused forward for one batch tile. Weights bf16, f32 accumulate."""

    def dense(h, w_ref, b_ref, relu):
        acc = jnp.dot(h, w_ref[...],
                      preferred_element_type=jnp.float32) + b_ref[...]
        if relu:
            # ReLU/bias stay f32 (v5e has no bf16 VALU); downcast once so the
            # next layer's loads and any spills move half the bytes.
            return jnp.maximum(acc, 0.0).astype(jnp.bfloat16)
        return acc

    x = x_ref[...].astype(jnp.bfloat16)

    # Feature trunk (Dropout(0.1) -> identity in eval mode).
    h = dense(x, w1_ref, b1_ref, relu=True)        # (TB, 512) bf16
    h = dense(h, w2_ref, b2_ref, relu=True)        # (TB, 256) bf16

    # Fused value/advantage hidden layers: cols 0..127 = value hidden,
    # cols 128..255 = advantage hidden.
    hcat = dense(h, wh_ref, bh_ref, relu=True)     # (TB, 256) bf16

    # Fused block-diagonal heads: lanes 0..A-1 = advantages, last lane = value,
    # remaining lanes = 0 (zero weights, zero bias).
    head = dense(hcat, wo_ref, bo_ref, relu=False)  # (TB, 128) f32

    head_n = head.shape[-1]
    lane = jax.lax.broadcasted_iota(jnp.int32, head.shape, 1)

    adv_mask = lane < action_dim
    adv_mean = jnp.sum(jnp.where(adv_mask, head, 0.0), axis=-1,
                       keepdims=True) * (1.0 / action_dim)
    value = jnp.sum(jnp.where(lane == head_n - 1, head, 0.0), axis=-1,
                    keepdims=True)

    # Lane-dense store: q in lanes 0..A-1, garbage elsewhere (sliced off in
    # the wrapper).
    q_ref[...] = value + (head - adv_mean)


def prepare_params(params, action_dim):
    """One-time weight prep: bf16 cast + stream/head fusion + lane padding.

    Call once and reuse the returned pytree; doing the casts per forward would
    triple the weight HBM traffic the bf16 cast is meant to save.
    """
    bf16, f32 = jnp.bfloat16, jnp.float32
    head_n = max(128, _round_up(action_dim + 1, 128))  # value lane + A adv lanes

    # Fused value/advantage hidden layer: (256, 256).
    w_hid = jnp.concatenate([params["wv1"], params["wa1"]], axis=1)
    b_hid = jnp.concatenate([params["bv1"], params["ba1"]], axis=1)

    # Block-diagonal fused head: (256, head_n).
    #   rows 0..127  (value hidden)  -> column head_n-1 = wv2
    #   rows 128..255 (adv hidden)   -> columns 0..A-1  = wa2
    w_head = jnp.zeros((256, head_n), f32)
    w_head = w_head.at[:128, head_n - 1:head_n].set(params["wv2"])
    w_head = w_head.at[128:, :action_dim].set(params["wa2"])
    b_head = jnp.zeros((1, head_n), f32)
    b_head = b_head.at[:, head_n - 1:head_n].set(params["bv2"])
    b_head = b_head.at[:, :action_dim].set(params["ba2"])

    return {
        "w1": params["w1"].astype(bf16), "b1": params["b1"].astype(f32),
        "w2": params["w2"].astype(bf16), "b2": params["b2"].astype(f32),
        "w_hid": w_hid.astype(bf16), "b_hid": b_hid.astype(f32),
        "w_head": w_head.astype(bf16), "b_head": b_head,
        "action_dim": action_dim,
    }


def dueling_forward(x, prepped, *, block_b=1024):
    """x: (B, state_dim) float32. Returns (B, action_dim) float32 Q-values."""
    B, state_dim = x.shape
    action_dim = prepped["action_dim"]
    head_n = prepped["w_head"].shape[1]

    # Batch tile: multiple of 16 (bf16 sublane packing); when B permits, keep
    # at least 2 grid steps so dimension_semantics=("parallel",) can shard the
    # batch axis across both v7x TensorCores.
    tb = min(block_b, max(16, _round_up(pl.cdiv(B, 2), 16)))
    b_pad = _round_up(B, tb)
    if b_pad != B:
        x = jnp.pad(x, ((0, b_pad - B), (0, 0)))
    grid = (b_pad // tb,)

    wnames = ["w1", "w2", "w_hid", "w_head"]
    bnames = ["b1", "b2", "b_hid", "b_head"]
    ws = [prepped[n] for n in wnames]
    bs = [prepped[n] for n in bnames]

    def pinned(arr):
        # Same block index every grid step -> fetched once, VMEM-resident.
        # TODO(synk): pipeline_mode=pl.Buffered(1) would drop the unused second
        # weight buffer (~430 KB) — only matters if TB is pushed up on v7x.
        return pl.BlockSpec(arr.shape, lambda i: (0, 0))

    in_specs = [pl.BlockSpec((tb, state_dim), lambda i: (i, 0))]
    operands = [x]
    for w, b in zip(ws, bs):
        in_specs += [pinned(w), pinned(b)]
        operands += [w, b]

    weight_bytes = sum(int(w.size) * 2 for w in ws)
    bias_bytes = sum(int(b.size) * 4 for b in bs)
    flops = 2 * b_pad * (state_dim * 512 + 512 * 256 + 256 * 256
                         + 256 * head_n)
    bytes_accessed = (b_pad * state_dim * 4 + weight_bytes + bias_bytes
                      + b_pad * head_n * 4)

    # Per-tile VMEM footprint (double-buffered x/out + pinned weights +
    # activations). Only raise the scoped limit if v5e's 16 MiB default would
    # be tight (large block_b); otherwise leave the compiler default.
    est_vmem = (2 * tb * state_dim * 4 + 2 * tb * head_n * 4
                + 2 * (weight_bytes + bias_bytes)
                + tb * (512 + 256 + 256 + head_n) * 4)
    vmem_limit = int(min(2 * est_vmem, 48 * 1024 * 1024)) \
        if est_vmem > 12 * 1024 * 1024 else None

    kernel = functools.partial(_dueling_kernel, action_dim=action_dim)

    out = pl.pallas_call(
        kernel,
        out_shape=jax.ShapeDtypeStruct((b_pad, head_n), jnp.float32),
        grid_spec=pltpu.PrefetchScalarGridSpec(
            num_scalar_prefetch=0,
            grid=grid,
            in_specs=in_specs,
            out_specs=pl.BlockSpec((tb, head_n), lambda i: (i, 0)),
        ),
        compiler_params=pltpu.CompilerParams(
            dimension_semantics=("parallel",),
            vmem_limit_bytes=vmem_limit),
        cost_estimate=pl.CostEstimate(
            flops=flops, transcendentals=0, bytes_accessed=bytes_accessed),
    )(*operands)
    return out[:B, :action_dim]


def init_params(key, state_dim, action_dim):
    """Deterministic init mimicking PyTorch nn.Linear default (+-1/sqrt(fan_in))."""
    dims = {
        "1": (state_dim, 512), "2": (512, 256),
        "v1": (256, 128), "v2": (128, 1),
        "a1": (256, 128), "a2": (128, action_dim),
    }
    params = {}
    keys = jax.random.split(key, 2 * len(dims))
    for i, (name, (fan_in, fan_out)) in enumerate(dims.items()):
        bound = 1.0 / float(jnp.sqrt(fan_in))
        params[f"w{name}"] = jax.random.uniform(
            keys[2 * i], (fan_in, fan_out), jnp.float32, -bound, bound)
        # biases stored (1, fan_out) so they stay 2-D inside the kernel
        params[f"b{name}"] = jax.random.uniform(
            keys[2 * i + 1], (1, fan_out), jnp.float32, -bound, bound)
    return params


def reference_forward(x, params):
    """Pure-JAX reference mirroring the kernel numerics (bf16 weights and
    inter-layer activations, f32 accumulate/bias/ReLU). Validates the kernel
    against bf16-JAX, not the original f32 PyTorch model."""
    bf16 = jnp.bfloat16

    def dense(h, w, b, relu):
        acc = jnp.dot(h.astype(bf16), w.astype(bf16),
                      preferred_element_type=jnp.float32) + b
        return jnp.maximum(acc, 0.0).astype(bf16) if relu else acc

    h = dense(x, params["w1"], params["b1"], True)
    h = dense(h, params["w2"], params["b2"], True)
    v = dense(h, params["wv1"], params["bv1"], True)
    value = dense(v, params["wv2"], params["bv2"], False)
    a = dense(h, params["wa1"], params["ba1"], True)
    adv = dense(a, params["wa2"], params["ba2"], False)
    return value + (adv - jnp.mean(adv, axis=1, keepdims=True))


if __name__ == "__main__":
    key = jax.random.PRNGKey(0)
    k_params, k_x = jax.random.split(key)

    batch, state_dim, action_dim = 8, 32, 4
    params = init_params(k_params, state_dim, action_dim)
    # One-time weight prep (bf16 cast + fusion) — cached, not per-call.
    prepped = prepare_params(params, action_dim)
    x = jax.random.normal(k_x, (batch, state_dim), jnp.float32)

    q = dueling_forward(x, prepped)
    q = jax.block_until_ready(q)

    ref = reference_forward(x, params)
    assert q.shape == (batch, action_dim)
    assert jnp.allclose(q, ref, atol=1e-2, rtol=1e-2), "mismatch vs reference"

    print("KERNEL_OK")
</pallas_src>

<mosaic_0001>
module attributes {stable_mosaic.version = 11 : i64} {
  func.func @_dueling_kernel(%arg0: i32, %arg1: memref<16x32xf32, #tpu.memory_space<vmem>>, %arg2: memref<32x512xbf16, #tpu.memory_space<vmem>>, %arg3: memref<1x512xf32, #tpu.memory_space<vmem>>, %arg4: memref<512x256xbf16, #tpu.memory_space<vmem>>, %arg5: memref<1x256xf32, #tpu.memory_space<vmem>>, %arg6: memref<256x256xbf16, #tpu.memory_space<vmem>>, %arg7: memref<1x256xf32, #tpu.memory_space<vmem>>, %arg8: memref<256x128xbf16, #tpu.memory_space<vmem>>, %arg9: memref<1x128xf32, #tpu.memory_space<vmem>>, %arg10: memref<16x128xf32, #tpu.memory_space<vmem>>) attributes {dimension_semantics = [#tpu.dimension_semantics<parallel>], iteration_bounds = array<i64: 1>, scalar_prefetch = 0 : i64, scratch_operands = 0 : i64, tpu.core_type = #tpu.core_type<tc>, window_params = [{transform_indices = @transform_0, window_bounds = array<i64: 16, 32>}, {pipeline_mode = #tpu.pipeline_mode<synchronous>, transform_indices = @transform_1, window_bounds = array<i64: 32, 512>}, {pipeline_mode = #tpu.pipeline_mode<synchronous>, transform_indices = @transform_2, window_bounds = array<i64: 1, 512>}, {pipeline_mode = #tpu.pipeline_mode<synchronous>, transform_indices = @transform_3, window_bounds = array<i64: 512, 256>}, {pipeline_mode = #tpu.pipeline_mode<synchronous>, transform_indices = @transform_4, window_bounds = array<i64: 1, 256>}, {pipeline_mode = #tpu.pipeline_mode<synchronous>, transform_indices = @transform_5, window_bounds = array<i64: 256, 256>}, {pipeline_mode = #tpu.pipeline_mode<synchronous>, transform_indices = @transform_6, window_bounds = array<i64: 1, 256>}, {pipeline_mode = #tpu.pipeline_mode<synchronous>, transform_indices = @transform_7, window_bounds = array<i64: 256, 128>}, {pipeline_mode = #tpu.pipeline_mode<synchronous>, transform_indices = @transform_8, window_bounds = array<i64: 1, 128>}, {transform_indices = @transform_9, window_bounds = array<i64: 16, 128>}]} {
    %c0 = arith.constant 0 : index
    %c0_0 = arith.constant 0 : index
    %0 = vector.load %arg1[%c0, %c0_0] : memref<16x32xf32, #tpu.memory_space<vmem>>, vector<16x32xf32>
    %1 = arith.truncf %0 : vector<16x32xf32> to vector<16x32xbf16>
    %c0_1 = arith.constant 0 : index
    %c0_2 = arith.constant 0 : index
    %2 = vector.load %arg2[%c0_1, %c0_2] : memref<32x512xbf16, #tpu.memory_space<vmem>>, vector<32x512xbf16>
    %cst = arith.constant dense<0.000000e+00> : vector<16x512xf32>
    %3 = tpu.matmul %1, %2, %cst {dimension_numbers = #tpu.dot_dimension_numbers<[1], [0], [0], [1], [0, 0, 1, 1], [], []>} : vector<16x32xbf16>, vector<32x512xbf16>, vector<16x512xf32> -> vector<16x512xf32>
    %c0_3 = arith.constant 0 : index
    %c0_4 = arith.constant 0 : index
    %4 = vector.load %arg3[%c0_3, %c0_4] : memref<1x512xf32, #tpu.memory_space<vmem>>, vector<1x512xf32>
    %5 = vector.broadcast %4 : vector<1x512xf32> to vector<16x512xf32>
    %6 = arith.addf %3, %5 : vector<16x512xf32>
    %cst_5 = arith.constant 0.000000e+00 : f32
    %7 = vector.broadcast %cst_5 : f32 to vector<16x512xf32>
    %8 = arith.maximumf %6, %7 : vector<16x512xf32>
    %9 = arith.truncf %8 : vector<16x512xf32> to vector<16x512xbf16>
    %c0_6 = arith.constant 0 : index
    %c0_7 = arith.constant 0 : index
    %10 = vector.load %arg4[%c0_6, %c0_7] : memref<512x256xbf16, #tpu.memory_space<vmem>>, vector<512x256xbf16>
    %cst_8 = arith.constant dense<0.000000e+00> : vector<16x256xf32>
    %11 = tpu.matmul %9, %10, %cst_8 {dimension_numbers = #tpu.dot_dimension_numbers<[1], [0], [0], [1], [0, 0, 1, 1], [], []>} : vector<16x512xbf16>, vector<512x256xbf16>, vector<16x256xf32> -> vector<16x256xf32>
    %c0_9 = arith.constant 0 : index
    %c0_10 = arith.constant 0 : index
    %12 = vector.load %arg5[%c0_9, %c0_10] : memref<1x256xf32, #tpu.memory_space<vmem>>, vector<1x256xf32>
    %13 = vector.broadcast %12 : vector<1x256xf32> to vector<16x256xf32>
    %14 = arith.addf %11, %13 : vector<16x256xf32>
    %cst_11 = arith.constant 0.000000e+00 : f32
    %15 = vector.broadcast %cst_11 : f32 to vector<16x256xf32>
    %16 = arith.maximumf %14, %15 : vector<16x256xf32>
    %17 = arith.truncf %16 : vector<16x256xf32> to vector<16x256xbf16>
    %c0_12 = arith.constant 0 : index
    %c0_13 = arith.constant 0 : index
    %18 = vector.load %arg6[%c0_12, %c0_13] : memref<256x256xbf16, #tpu.memory_space<vmem>>, vector<256x256xbf16>
    %cst_14 = arith.constant dense<0.000000e+00> : vector<16x256xf32>
    %19 = tpu.matmul %17, %18, %cst_14 {dimension_numbers = #tpu.dot_dimension_numbers<[1], [0], [0], [1], [0, 0, 1, 1], [], []>} : vector<16x256xbf16>, vector<256x256xbf16>, vector<16x256xf32> -> vector<16x256xf32>
    %c0_15 = arith.constant 0 : index
    %c0_16 = arith.constant 0 : index
    %20 = vector.load %arg7[%c0_15, %c0_16] : memref<1x256xf32, #tpu.memory_space<vmem>>, vector<1x256xf32>
    %21 = vector.broadcast %20 : vector<1x256xf32> to vector<16x256xf32>
    %22 = arith.addf %19, %21 : vector<16x256xf32>
    %cst_17 = arith.constant 0.000000e+00 : f32
    %23 = vector.broadcast %cst_17 : f32 to vector<16x256xf32>
    %24 = arith.maximumf %22, %23 : vector<16x256xf32>
    %25 = arith.truncf %24 : vector<16x256xf32> to vector<16x256xbf16>
    %c0_18 = arith.constant 0 : index
    %c0_19 = arith.constant 0 : index
    %26 = vector.load %arg8[%c0_18, %c0_19] : memref<256x128xbf16, #tpu.memory_space<vmem>>, vector<256x128xbf16>
    %cst_20 = arith.constant dense<0.000000e+00> : vector<16x128xf32>
    %27 = tpu.matmul %25, %26, %cst_20 {dimension_numbers = #tpu.dot_dimension_numbers<[1], [0], [0], [1], [0, 0, 1, 1], [], []>} : vector<16x256xbf16>, vector<256x128xbf16>, vector<16x128xf32> -> vector<16x128xf32>
    %c0_21 = arith.constant 0 : index
    %c0_22 = arith.constant 0 : index
    %28 = vector.load %arg9[%c0_21, %c0_22] : memref<1x128xf32, #tpu.memory_space<vmem>>, vector<1x128xf32>
    %29 = vector.broadcast %28 : vector<1x128xf32> to vector<16x128xf32>
    %30 = arith.addf %27, %29 : vector<16x128xf32>
    %31 = tpu.iota {dimensions = array<i32: 1>} : vector<16x128xi32>
    %c4_i32 = arith.constant 4 : i32
    %32 = vector.broadcast %c4_i32 : i32 to vector<16x128xi32>
    %33 = arith.cmpi slt, %31, %32 : vector<16x128xi32>
    %cst_23 = arith.constant 0.000000e+00 : f32
    %34 = vector.broadcast %cst_23 : f32 to vector<16x128xf32>
    %35 = arith.select %33, %30, %34 : vector<16x128xi1>, vector<16x128xf32>
    %cst_24 = arith.constant dense<0.000000e+00> : vector<16xf32>
    %36 = vector.multi_reduction <add>, %35, %cst_24 [1] : vector<16x128xf32> to vector<16xf32>
    %37 = vector.shape_cast %36 : vector<16xf32> to vector<16x1xf32>
    %cst_25 = arith.constant 2.500000e-01 : f32
    %38 = vector.broadcast %cst_25 : f32 to vector<16x1xf32>
    %39 = arith.mulf %37, %38 : vector<16x1xf32>
    %c127_i32 = arith.constant 127 : i32
    %40 = vector.broadcast %c127_i32 : i32 to vector<16x128xi32>
    %41 = arith.cmpi eq, %31, %40 : vector<16x128xi32>
    %cst_26 = arith.constant 0.000000e+00 : f32
    %42 = vector.broadcast %cst_26 : f32 to vector<16x128xf32>
    %43 = arith.select %41, %30, %42 : vector<16x128xi1>, vector<16x128xf32>
    %cst_27 = arith.constant dense<0.000000e+00> : vector<16xf32>
    %44 = vector.multi_reduction <add>, %43, %cst_27 [1] : vector<16x128xf32> to vector<16xf32>
    %45 = vector.shape_cast %44 : vector<16xf32> to vector<16x1xf32>
    %46 = vector.broadcast %39 : vector<16x1xf32> to vector<16x128xf32>
    %47 = arith.subf %30, %46 : vector<16x128xf32>
    %48 = vector.broadcast %45 : vector<16x1xf32> to vector<16x128xf32>
    %49 = arith.addf %48, %47 : vector<16x128xf32>
    %c0_28 = arith.constant 0 : index
    %c0_29 = arith.constant 0 : index
    %50 = vector.load %arg10[%c0_28, %c0_29] : memref<16x128xf32, #tpu.memory_space<vmem>>, vector<16x128xf32>
    tpu.vector_store %arg10[%c0_28, %c0_29], %49 {strides = array<i32>} : memref<16x128xf32, #tpu.memory_space<vmem>>, vector<16x128xf32>,
    return
  }
  func.func @transform_0(%arg0: i32) -> (i32, i32) {
    %c0_i32 = arith.constant 0 : i32
    %c0_i32_0 = arith.constant 0 : i32
    return %arg0, %c0_i32 : i32, i32
  }
  func.func @transform_1(%arg0: i32) -> (i32, i32) {
    %c0_i32 = arith.constant 0 : i32
    %c0_i32_0 = arith.constant 0 : i32
    %c0_i32_1 = arith.constant 0 : i32
    return %c0_i32, %c0_i32_0 : i32, i32
  }
  func.func @transform_2(%arg0: i32) -> (i32, i32) {
    %c0_i32 = arith.constant 0 : i32
    %c0_i32_0 = arith.constant 0 : i32
    %c0_i32_1 = arith.constant 0 : i32
    return %c0_i32, %c0_i32_0 : i32, i32
  }
  func.func @transform_3(%arg0: i32) -> (i32, i32) {
    %c0_i32 = arith.constant 0 : i32
    %c0_i32_0 = arith.constant 0 : i32
    %c0_i32_1 = arith.constant 0 : i32
    return %c0_i32, %c0_i32_0 : i32, i32
  }
  func.func @transform_4(%arg0: i32) -> (i32, i32) {
    %c0_i32 = arith.constant 0 : i32
    %c0_i32_0 = arith.constant 0 : i32
    %c0_i32_1 = arith.constant 0 : i32
    return %c0_i32, %c0_i32_0 : i32, i32
  }
  func.func @transform_5(%arg0: i32) -> (i32, i32) {
    %c0_i32 = arith.constant 0 : i32
    %c0_i32_0 = arith.constant 0 : i32
    %c0_i32_1 = arith.constant 0 : i32
    return %c0_i32, %c0_i32_0 : i32, i32
  }
  func.func @transform_6(%arg0: i32) -> (i32, i32) {
    %c0_i32 = arith.constant 0 : i32
    %c0_i32_0 = arith.constant 0 : i32
    %c0_i32_1 = arith.constant 0 : i32
    return %c0_i32, %c0_i32_0 : i32, i32
  }
  func.func @transform_7(%arg0: i32) -> (i32, i32) {
    %c0_i32 = arith.constant 0 : i32
    %c0_i32_0 = arith.constant 0 : i32
    %c0_i32_1 = arith.constant 0 : i32
    return %c0_i32, %c0_i32_0 : i32, i32
  }
  func.func @transform_8(%arg0: i32) -> (i32, i32) {
    %c0_i32 = arith.constant 0 : i32
    %c0_i32_0 = arith.constant 0 : i32
    %c0_i32_1 = arith.constant 0 : i32
    return %c0_i32, %c0_i32_0 : i32, i32
  }
  func.func @transform_9(%arg0: i32) -> (i32, i32) {
    %c0_i32 = arith.constant 0 : i32
    %c0_i32_0 = arith.constant 0 : i32
    return %arg0, %c0_i32 : i32, i32
  }
}

</mosaic_0001>

<llo_original>
// kernel: tpu_custom_call.1
$region0: #{tpu_custom_call.1}
  #allocation0 [shape = 'u32[]', space=smem, size = 0x4, offset = 0x4, fixed_abs, tag = 'smem constant byte address 0x4 - core index']
  #allocation1 [shape = 'u32[144,128]{1,0:T(1,128)}', space=vmem, size = 0x12000, scoped, tag = 'internal scratch']
  %s0 = inlined_call_operand.hbm [shape: f32[16,32], index: 0, kind: input, shape index: {}]
  %s1 = inlined_call_operand.hbm [shape: bf16[32,512], index: 1, kind: input, shape index: {}]
  %s2 = inlined_call_operand.vmem [shape: f32[1,512], index: 2, kind: input, shape index: {}]
  %s3 = inlined_call_operand.hbm [shape: bf16[512,256], index: 3, kind: input, shape index: {}]
  %s4 = inlined_call_operand.vmem [shape: f32[1,256], index: 4, kind: input, shape index: {}]
  %s5 = inlined_call_operand.hbm [shape: bf16[256,256], index: 5, kind: input, shape index: {}]
  %s6 = inlined_call_operand.vmem [shape: f32[1,256], index: 6, kind: input, shape index: {}]
  %s7 = inlined_call_operand.hbm [shape: bf16[256,128], index: 7, kind: input, shape index: {}]
  %s8 = inlined_call_operand.vmem [shape: f32[1,128], index: 8, kind: input, shape index: {}]
  %s9 = inlined_call_operand.hbm [shape: f32[16,128], index: 9, kind: output, shape index: {}]
  %s10 = sld [smem:[#allocation0]]
  $region66: #{tpu_custom_call.1} parent=0
    _
  %s12 = ssub.s32 1, %s10
  %s13 = scalar_select 0, %s12, %s10
  $region1: #{tpu_custom_call.1} parent=0
    #allocation2 [shape = 'u8[8192]{0}', space=vmem, size = 0x2000, scoped, tag = 'input window, operand 0, single buffered']
    #allocation3 [shape = 's32[1]{0}', space=sflag, size = 0x4, scoped, tag = 'scoped memory for tpu_custom_call.1']
    #allocation4 [shape = 's32[1]{0}', space=sflag, size = 0x4, scoped, tag = 'scoped memory for tpu_custom_call.1']
    #allocation5 [shape = 'u8[32768]{0}', space=vmem, size = 0x8000, scoped, tag = 'input window, operand 1, single buffered']
    #allocation6 [shape = 's32[1]{0}', space=sflag, size = 0x4, scoped, tag = 'scoped memory for tpu_custom_call.1']
    #allocation7 [shape = 'u8[262144]{0}', space=vmem, size = 0x40000, scoped, tag = 'input window, operand 3, single buffered']
    #allocation8 [shape = 'u8[131072]{0}', space=vmem, size = 0x20000, scoped, tag = 'input window, operand 5, single buffered']
    #allocation9 [shape = 's32[1]{0}', space=sflag, size = 0x4, scoped, tag = 'scoped memory for tpu_custom_call.1']
    #allocation10 [shape = 'u8[65536]{0}', space=vmem, size = 0x10000, scoped, tag = 'input window, operand 7, single buffered']
    #allocation11 [shape = 'u8[8192]{0}', space=vmem, size = 0x2000, scoped, tag = 'output window, operand 0, single buffered']
    %14 = vsyncpa [#allocation3], 0
    %15 = vsyncpa [#allocation6], 0
    %16 = vsyncpa [#allocation9], 0
    %17 = vsyncpa [#allocation4], 0
    // Predicated region
    $region2: #{tpu_custom_call.1} parent=1 // pred_check
      _
    $region3: #{tpu_custom_call.1} parent=1 // pred_check_branch
      %19 = sbr.rel (0) target = $region5
    $region4: #{tpu_custom_call.1} parent=1 // pred_region
      %s21 = ssub.s32 256, 256
      %22 = vsyncadd [#allocation3], %s21
      %s23 = sshll.u32 [#allocation2], 4
      %s24 = int_to_ptr.vmem [resolvable:$true] %s23
      %29 = dma.hbm_to_vmem [thread:$0]  %s0, 256, %s24, [#allocation3], 128, 128, 8
    $region5: #{tpu_custom_call.1} parent=1 // pred_fallthru
      _
    // Predicated region
    $region6: #{tpu_custom_call.1} parent=1 // pred_check
      _
    $region7: #{tpu_custom_call.1} parent=1 // pred_check_branch
      %31 = sbr.rel (0) target = $region9
    $region8: #{tpu_custom_call.1} parent=1 // pred_region
      %s33 = ssub.s32 1024, 1024
      %34 = vsyncadd [#allocation6], %s33
      %s35 = sshll.u32 [#allocation5], 4
      %s36 = int_to_ptr.vmem [resolvable:$true] %s35
      %41 = dma.hbm_to_vmem [thread:$0]  %s1, 1024, %s36, [#allocation6], 256, 256, 16
    $region9: #{tpu_custom_call.1} parent=1 // pred_fallthru
      _
    // Predicated region
    $region10: #{tpu_custom_call.1} parent=1 // pred_check
      _
    $region11: #{tpu_custom_call.1} parent=1 // pred_check_branch
      %43 = sbr.rel (0) target = $region13
    $region12: #{tpu_custom_call.1} parent=1 // pred_region
      _
    $region13: #{tpu_custom_call.1} parent=1 // pred_fallthru
      _
    // Predicated region
    $region14: #{tpu_custom_call.1} parent=1 // pred_check
      _
    $region15: #{tpu_custom_call.1} parent=1 // pred_check_branch
      %45 = sbr.rel (0) target = $region17
    $region16: #{tpu_custom_call.1} parent=1 // pred_region
      %s47 = ssub.s32 8192, 8192
      %48 = vsyncadd [#allocation6], %s47
      %s49 = sshll.u32 [#allocation7], 4
      %s50 = int_to_ptr.vmem [resolvable:$true] %s49
      %55 = dma.hbm_to_vmem [thread:$0]  %s3, 8192, %s50, [#allocation6], 128, 128, 8
    $region17: #{tpu_custom_call.1} parent=1 // pred_fallthru
      _
    // Predicated region
    $region18: #{tpu_custom_call.1} parent=1 // pred_check
      _
    $region19: #{tpu_custom_call.1} parent=1 // pred_check_branch
      %57 = sbr.rel (0) target = $region21
    $region20: #{tpu_custom_call.1} parent=1 // pred_region
      _
    $region21: #{tpu_custom_call.1} parent=1 // pred_fallthru
      _
    // Predicated region
    $region22: #{tpu_custom_call.1} parent=1 // pred_check
      _
    $region23: #{tpu_custom_call.1} parent=1 // pred_check_branch
      %59 = sbr.rel (0) target = $region25
    $region24: #{tpu_custom_call.1} parent=1 // pred_region
      %s61 = ssub.s32 4096, 4096
      %62 = vsyncadd [#allocation9], %s61
      %s63 = sshll.u32 [#allocation8], 4
      %s64 = int_to_ptr.vmem [resolvable:$true] %s63
      %69 = dma.hbm_to_vmem [thread:$0]  %s5, 4096, %s64, [#allocation9], 128, 128, 8
    $region25: #{tpu_custom_call.1} parent=1 // pred_fallthru
      _
    // Predicated region
    $region26: #{tpu_custom_call.1} parent=1 // pred_check
      _
    $region27: #{tpu_custom_call.1} parent=1 // pred_check_branch
      %71 = sbr.rel (0) target = $region29
    $region28: #{tpu_custom_call.1} parent=1 // pred_region
      _
    $region29: #{tpu_custom_call.1} parent=1 // pred_fallthru
      _
    // Predicated region
    $region30: #{tpu_custom_call.1} parent=1 // pred_check
      _
    $region31: #{tpu_custom_call.1} parent=1 // pred_check_branch
      %73 = sbr.rel (0) target = $region33
    $region32: #{tpu_custom_call.1} parent=1 // pred_region
      %s75 = ssub.s32 2048, 2048
      %76 = vsyncadd [#allocation9], %s75
      %s77 = sshll.u32 [#allocation10], 4
      %s78 = int_to_ptr.vmem [resolvable:$true] %s77
      %83 = dma.hbm_to_vmem [thread:$0]  %s7, 2048, %s78, [#allocation9], 64, 64, 4
    $region33: #{tpu_custom_call.1} parent=1 // pred_fallthru
      _
    // Predicated region
    $region34: #{tpu_custom_call.1} parent=1 // pred_check
      _
    $region35: #{tpu_custom_call.1} parent=1 // pred_check_branch
      %85 = sbr.rel (0) target = $region37
    $region36: #{tpu_custom_call.1} parent=1 // pred_region
      _
    $region37: #{tpu_custom_call.1} parent=1 // pred_fallthru
      _
    // Predicated region
    $region38: #{tpu_custom_call.1} parent=1 // pred_check
      _
    $region39: #{tpu_custom_call.1} parent=1 // pred_check_branch
      %87 = sbr.rel (0) target = $region41
    $region40: #{tpu_custom_call.1} parent=1 // pred_region
      %88 = dma.done [#allocation3], 256
    $region41: #{tpu_custom_call.1} parent=1 // pred_fallthru
      _
    // Predicated region
    $region42: #{tpu_custom_call.1} parent=1 // pred_check
      _
    $region43: #{tpu_custom_call.1} parent=1 // pred_check_branch
      %90 = sbr.rel (0) target = $region45
    $region44: #{tpu_custom_call.1} parent=1 // pred_region
      %91 = dma.done [#allocation6], 1024
    $region45: #{tpu_custom_call.1} parent=1 // pred_fallthru
      _
    // Predicated region
    $region46: #{tpu_custom_call.1} parent=1 // pred_check
      _
    $region47: #{tpu_custom_call.1} parent=1 // pred_check_branch
      %93 = sbr.rel (0) target = $region49
    $region48: #{tpu_custom_call.1} parent=1 // pred_region
      %94 = dma.done [#allocation6], 8192
    $region49: #{tpu_custom_call.1} parent=1 // pred_fallthru
      _
    // Predicated region
    $region50: #{tpu_custom_call.1} parent=1 // pred_check
      _
    $region51: #{tpu_custom_call.1} parent=1 // pred_check_branch
      %96 = sbr.rel (0) target = $region53
    $region52: #{tpu_custom_call.1} parent=1 // pred_region
      %97 = dma.done [#allocation9], 4096
    $region53: #{tpu_custom_call.1} parent=1 // pred_fallthru
      _
    // Predicated region
    $region54: #{tpu_custom_call.1} parent=1 // pred_check
      _
    $region55: #{tpu_custom_call.1} parent=1 // pred_check_branch
      %99 = sbr.rel (0) target = $region57
    $region56: #{tpu_custom_call.1} parent=1 // pred_region
      %100 = dma.done [#allocation9], 2048
    $region57: #{tpu_custom_call.1} parent=1 // pred_fallthru
      _
    %v102 = vld [vmem:[#allocation2] sm:$0xff]
    %v103 = vld [vmem:[#allocation2 + $0x8] sm:$0xff]
    %v104 = vpack.c.bf16 %v103, %v102
    %v105 = vld [vmem:[#allocation5] sm:$0xff]
    %v106 = vld [vmem:[#allocation5 + $0x8] sm:$0xff]
    %v107 = vld [vmem:[#allocation5 + $0x10] sm:$0xff]
    %v108 = vld [vmem:[#allocation5 + $0x18] sm:$0xff]
    %v109 = vld [vmem:[#allocation5 + $0x20] sm:$0xff]
    %v110 = vld [vmem:[#allocation5 + $0x28] sm:$0xff]
    %v111 = vld [vmem:[#allocation5 + $0x30] sm:$0xff]
    %v112 = vld [vmem:[#allocation5 + $0x38] sm:$0xff]
    %v113 = vld [vmem:[%s2] sm:$0xf]
    %v115 = vlaneseq
    %v116 = vshrl.u32 %v115, 7
    %v117 = vsub.s32 0, %v116
    %v118 = vrot.slane %v113, %v117
    %v119 = vlaneseq
    %v120 = vshrl.u32 %v119, 7
    %v121 = vsub.s32 1, %v120
    %v122 = vrot.slane %v113, %v121
    %v123 = vlaneseq
    %v124 = vshrl.u32 %v123, 7
    %v125 = vsub.s32 2, %v124
    %v126 = vrot.slane %v113, %v125
    %v127 = vlaneseq
    %v128 = vshrl.u32 %v127, 7
    %v129 = vsub.s32 3, %v128
    %v130 = vrot.slane %v113, %v129
    %v143 = vunpack.c.l.b16 %v105
    %v144 = vunpack.c.h.b16 %v105
    %v145 = vunpack.c.l.b16 %v106
    %v146 = vunpack.c.h.b16 %v106
    %v147 = vunpack.c.l.b16 %v107
    %v148 = vunpack.c.h.b16 %v107
    %v149 = vunpack.c.l.b16 %v108
    %v150 = vunpack.c.h.b16 %v108
    %v151 = vunpack.c.l.b16 %v109
    %v152 = vunpack.c.h.b16 %v109
    %v153 = vunpack.c.l.b16 %v110
    %v154 = vunpack.c.h.b16 %v110
    %v155 = vunpack.c.l.b16 %v111
    %v156 = vunpack.c.h.b16 %v111
    %v157 = vunpack.c.l.b16 %v112
    %v158 = vunpack.c.h.b16 %v112
    %v159 = vpack.c.b16 %v147, %v143
    %v160 = vpack.c.b16 %v148, %v144
    %v161 = vpack.c.b16 %v149, %v145
    %v162 = vpack.c.b16 %v150, %v146
    %v163 = vpack.c.b16 %v155, %v151
    %v164 = vpack.c.b16 %v156, %v152
    %v165 = vpack.c.b16 %v157, %v153
    %v166 = vpack.c.b16 %v158, %v154
    %vm175 = vcmask 261120
    %v177 = vsel %vm175, %v104, 0
    %179 = vmatprep.subr.bf16.mxu0 %v160
    %180 = vmatpush1.bf16.msra.mxu0 %v159
    %181 = vmatprep.subr.bf16.mxu0 %v164
    %182 = vmatpush1.bf16.msra.mxu0 %v163
    %183 = vmatprep.subr.bf16.mxu0 0
    %184 = vmatpush1.bf16.msra.mxu0 0
    %185 = vmatprep.subr.bf16.mxu0 0
    %186 = vmatpush1.bf16.msra.mxu0 0
    %187 = vmatprep.subr.bf16.mxu0 0
    %188 = vmatpush1.bf16.msra.mxu0 0
    %189 = vmatprep.subr.bf16.mxu0 0
    %190 = vmatpush1.bf16.msra.mxu0 0
    %191 = vmatprep.subr.bf16.mxu0 0
    %192 = vmatpush1.bf16.msra.mxu0 0
    %193 = vmatprep.subr.bf16.mxu0 0
    %194 = vmatpush1.bf16.msra.mxu0 0
    %195 = vmatprep.subr.bf16.mxu0 0
    %196 = vmatpush1.bf16.msra.mxu0 0
    %197 = vmatprep.subr.bf16.mxu0 0
    %198 = vmatpush1.bf16.msra.mxu0 0
    %199 = vmatprep.subr.bf16.mxu0 0
    %200 = vmatpush1.bf16.msra.mxu0 0
    %201 = vmatprep.subr.bf16.mxu0 0
    %202 = vmatpush1.bf16.msra.mxu0 0
    %203 = vmatprep.subr.bf16.mxu0 0
    %204 = vmatpush1.bf16.msra.mxu0 0
    %205 = vmatprep.subr.bf16.mxu0 0
    %206 = vmatpush1.bf16.msra.mxu0 0
    %207 = vmatprep.subr.bf16.mxu0 0
    %208 = vmatpush1.bf16.msra.mxu0 0
    %209 = vmatprep.subr.bf16.mxu0 0
    %210 = vmatpush1.bf16.msra.mxu0 0
    %211 = vmatprep.mubr.bf16.mxu0 0
    %212 = vmatmul.mubr.bf16.gmra.mrb[0].mxu0 %v177
    %v213 = vpop.f32.mrb[0].mxu0
    %v214 = vadd.f32 %v118, %v213
    %v215 = vpop.f32.mrb[0].mxu0
    %v216 = vadd.f32 %v122, %v215
    %v217 = vpop.f32.mrb[0].mxu0
    %v218 = vadd.f32 %v118, %v217
    %v219 = vpop.f32.mrb[0].mxu0
    %v220 = vadd.f32 %v122, %v219
    %221 = vdwg.mxu0
    %222 = vmatprep.subr.bf16.mxu0 %v162
    %223 = vmatpush1.bf16.msra.mxu0 %v161
    %224 = vmatprep.subr.bf16.mxu0 %v166
    %225 = vmatpush1.bf16.msra.mxu0 %v165
    %226 = vmatprep.subr.bf16.mxu0 0
    %227 = vmatpush1.bf16.msra.mxu0 0
    %228 = vmatprep.subr.bf16.mxu0 0
    %229 = vmatpush1.bf16.msra.mxu0 0
    %230 = vmatprep.subr.bf16.mxu0 0
    %231 = vmatpush1.bf16.msra.mxu0 0
    %232 = vmatprep.subr.bf16.mxu0 0
    %233 = vmatpush1.bf16.msra.mxu0 0
    %234 = vmatprep.subr.bf16.mxu0 0
    %235 = vmatpush1.bf16.msra.mxu0 0
    %236 = vmatprep.subr.bf16.mxu0 0
    %237 = vmatpush1.bf16.msra.mxu0 0
    %238 = vmatprep.subr.bf16.mxu0 0
    %239 = vmatpush1.bf16.msra.mxu0 0
    %240 = vmatprep.subr.bf16.mxu0 0
    %241 = vmatpush1.bf16.msra.mxu0 0
    %242 = vmatprep.subr.bf16.mxu0 0
    %243 = vmatpush1.bf16.msra.mxu0 0
    %244 = vmatprep.subr.bf16.mxu0 0
    %245 = vmatpush1.bf16.msra.mxu0 0
    %246 = vmatprep.subr.bf16.mxu0 0
    %247 = vmatpush1.bf16.msra.mxu0 0
    %248 = vmatprep.subr.bf16.mxu0 0
    %249 = vmatpush1.bf16.msra.mxu0 0
    %250 = vmatprep.subr.bf16.mxu0 0
    %251 = vmatpush1.bf16.msra.mxu0 0
    %252 = vmatprep.subr.bf16.mxu0 0
    %253 = vmatpush1.bf16.msra.mxu0 0
    %254 = vmatprep.mubr.bf16.mxu0 0
    %255 = vmatmul.mubr.bf16.gmra.mrb[0].mxu0 %v177
    %v256 = vpop.f32.mrb[0].mxu0
    %v257 = vadd.f32 %v126, %v256
    %v258 = vpop.f32.mrb[0].mxu0
    %v259 = vadd.f32 %v130, %v258
    %v260 = vpop.f32.mrb[0].mxu0
    %v261 = vadd.f32 %v126, %v260
    %v262 = vpop.f32.mrb[0].mxu0
    %v263 = vadd.f32 %v130, %v262
    %264 = vdwg.mxu0
    %v265 = vmax.f32 %v214, 0.0
    %v266 = vmax.f32 %v216, 0.0
    %v267 = vmax.f32 %v257, 0.0
    %v268 = vmax.f32 %v259, 0.0
    %v269 = vmax.f32 %v218, 0.0
    %v270 = vmax.f32 %v220, 0.0
    %v271 = vmax.f32 %v261, 0.0
    %v272 = vmax.f32 %v263, 0.0
    %v273 = vpack.c.bf16 %v269, %v265
    %v274 = vpack.c.bf16 %v270, %v266
    %v275 = vpack.c.bf16 %v271, %v267
    %v276 = vpack.c.bf16 %v272, %v268
    %v277 = vld [vmem:[#allocation7] sm:$0xff]
    %v278 = vld [vmem:[#allocation7 + $0x8] sm:$0xff]
    %v279 = vld [vmem:[#allocation7 + $0x10] sm:$0xff]
    %v280 = vld [vmem:[#allocation7 + $0x18] sm:$0xff]
    %v281 = vld [vmem:[#allocation7 + $0x20] sm:$0xff]
    %v282 = vld [vmem:[#allocation7 + $0x28] sm:$0xff]
    %v283 = vld [vmem:[#allocation7 + $0x30] sm:$0xff]
    %v284 = vld [vmem:[#allocation7 + $0x38] sm:$0xff]
    %v285 = vld [vmem:[#allocation7 + $0x40] sm:$0xff]
    %v286 = vld [vmem:[#allocation7 + $0x48] sm:$0xff]
    %v287 = vld [vmem:[#allocation7 + $0x50] sm:$0xff]
    %v288 = vld [vmem:[#allocation7 + $0x58] sm:$0xff]
    %v289 = vld [vmem:[#allocation7 + $0x60] sm:$0xff]
    %v290 = vld [vmem:[#allocation7 + $0x68] sm:$0xff]
    %v291 = vld [vmem:[#allocation7 + $0x70] sm:$0xff]
    %v292 = vld [vmem:[#allocation7 + $0x78] sm:$0xff]
    %v293 = vld [vmem:[#allocation7 + $0x80] sm:$0xff]
    %v294 = vld [vmem:[#allocation7 + $0x88] sm:$0xff]
    %v295 = vld [vmem:[#allocation7 + $0x90] sm:$0xff]
    %v296 = vld [vmem:[#allocation7 + $0x98] sm:$0xff]
    %v297 = vld [vmem:[#allocation7 + $0xa0] sm:$0xff]
    %v298 = vld [vmem:[#allocation7 + $0xa8] sm:$0xff]
    %v299 = vld [vmem:[#allocation7 + $0xb0] sm:$0xff]
    %v300 = vld [vmem:[#allocation7 + $0xb8] sm:$0xff]
    %v301 = vld [vmem:[#allocation7 + $0xc0] sm:$0xff]
    %v302 = vld [vmem:[#allocation7 + $0xc8] sm:$0xff]
    %v303 = vld [vmem:[#allocation7 + $0xd0] sm:$0xff]
    %v304 = vld [vmem:[#allocation7 + $0xd8] sm:$0xff]
    %v305 = vld [vmem:[#allocation7 + $0xe0] sm:$0xff]
    %v306 = vld [vmem:[#allocation7 + $0xe8] sm:$0xff]
    %v307 = vld [vmem:[#allocation7 + $0xf0] sm:$0xff]
    %v308 = vld [vmem:[#allocation7 + $0xf8] sm:$0xff]
    %v309 = vld [vmem:[#allocation7 + $0x100] sm:$0xff]
    %v310 = vld [vmem:[#allocation7 + $0x108] sm:$0xff]
    %v311 = vld [vmem:[#allocation7 + $0x110] sm:$0xff]
    %v312 = vld [vmem:[#allocation7 + $0x118] sm:$0xff]
    %v313 = vld [vmem:[#allocation7 + $0x120] sm:$0xff]
    %v314 = vld [vmem:[#allocation7 + $0x128] sm:$0xff]
    %v315 = vld [vmem:[#allocation7 + $0x130] sm:$0xff]
    %v316 = vld [vmem:[#allocation7 + $0x138] sm:$0xff]
    %v317 = vld [vmem:[#allocation7 + $0x140] sm:$0xff]
    %v318 = vld [vmem:[#allocation7 + $0x148] sm:$0xff]
    %v319 = vld [vmem:[#allocation7 + $0x150] sm:$0xff]
    %v320 = vld [vmem:[#allocation7 + $0x158] sm:$0xff]
    %v321 = vld [vmem:[#allocation7 + $0x160] sm:$0xff]
    %v322 = vld [vmem:[#allocation7 + $0x168] sm:$0xff]
    %v323 = vld [vmem:[#allocation7 + $0x170] sm:$0xff]
    %v324 = vld [vmem:[#allocation7 + $0x178] sm:$0xff]
    %v325 = vld [vmem:[#allocation7 + $0x180] sm:$0xff]
    %v326 = vld [vmem:[#allocation7 + $0x188] sm:$0xff]
    %v327 = vld [vmem:[#allocation7 + $0x190] sm:$0xff]
    %v328 = vld [vmem:[#allocation7 + $0x198] sm:$0xff]
    %v329 = vld [vmem:[#allocation7 + $0x1a0] sm:$0xff]
    %v330 = vld [vmem:[#allocation7 + $0x1a8] sm:$0xff]
    %v331 = vld [vmem:[#allocation7 + $0x1b0] sm:$0xff]
    %v332 = vld [vmem:[#allocation7 + $0x1b8] sm:$0xff]
    %v333 = vld [vmem:[#allocation7 + $0x1c0] sm:$0xff]
    %v334 = vld [vmem:[#allocation7 + $0x1c8] sm:$0xff]
    %v335 = vld [vmem:[#allocation7 + $0x1d0] sm:$0xff]
    %v336 = vld [vmem:[#allocation7 + $0x1d8] sm:$0xff]
    %v337 = vld [vmem:[#allocation7 + $0x1e0] sm:$0xff]
    %v338 = vld [vmem:[#allocation7 + $0x1e8] sm:$0xff]
    %v339 = vld [vmem:[#allocation7 + $0x1f0] sm:$0xff]
    %v340 = vld [vmem:[#allocation7 + $0x1f8] sm:$0xff]
    %v341 = vld [vmem:[%s4] sm:$0x3]
    %v343 = vlaneseq
    %v344 = vshrl.u32 %v343, 7
    %v345 = vsub.s32 0, %v344
    %v346 = vrot.slane %v341, %v345
    %v347 = vlaneseq
    %v348 = vshrl.u32 %v347, 7
    %v349 = vsub.s32 1, %v348
    %v350 = vrot.slane %v341, %v349
    %v417 = vunpack.c.l.b16 %v277
    %v418 = vunpack.c.h.b16 %v277
    %v419 = vunpack.c.l.b16 %v278
    %v420 = vunpack.c.h.b16 %v278
    %v421 = vunpack.c.l.b16 %v279
    %v422 = vunpack.c.h.b16 %v279
    %v423 = vunpack.c.l.b16 %v280
    %v424 = vunpack.c.h.b16 %v280
    %v425 = vunpack.c.l.b16 %v281
    %v426 = vunpack.c.h.b16 %v281
    %v427 = vunpack.c.l.b16 %v282
    %v428 = vunpack.c.h.b16 %v282
    %v429 = vunpack.c.l.b16 %v283
    %v430 = vunpack.c.h.b16 %v283
    %v431 = vunpack.c.l.b16 %v284
    %v432 = vunpack.c.h.b16 %v284
    %v433 = vunpack.c.l.b16 %v285
    %v434 = vunpack.c.h.b16 %v285
    %v435 = vunpack.c.l.b16 %v286
    %v436 = vunpack.c.h.b16 %v286
    %v437 = vunpack.c.l.b16 %v287
    %v438 = vunpack.c.h.b16 %v287
    %v439 = vunpack.c.l.b16 %v288
    %v440 = vunpack.c.h.b16 %v288
    %v441 = vunpack.c.l.b16 %v289
    %v442 = vunpack.c.h.b16 %v289
    %v443 = vunpack.c.l.b16 %v290
    %v444 = vunpack.c.h.b16 %v290
    %v445 = vunpack.c.l.b16 %v291
    %v446 = vunpack.c.h.b16 %v291
    %v447 = vunpack.c.l.b16 %v292
    %v448 = vunpack.c.h.b16 %v292
    %v449 = vunpack.c.l.b16 %v293
    %v450 = vunpack.c.h.b16 %v293
    %v451 = vunpack.c.l.b16 %v294
    %v452 = vunpack.c.h.b16 %v294
    %v453 = vunpack.c.l.b16 %v295
    %v454 = vunpack.c.h.b16 %v295
    %v455 = vunpack.c.l.b16 %v296
    %v456 = vunpack.c.h.b16 %v296
    %v457 = vunpack.c.l.b16 %v297
    %v458 = vunpack.c.h.b16 %v297
    %v459 = vunpack.c.l.b16 %v298
    %v460 = vunpack.c.h.b16 %v298
    %v461 = vunpack.c.l.b16 %v299
    %v462 = vunpack.c.h.b16 %v299
    %v463 = vunpack.c.l.b16 %v300
    %v464 = vunpack.c.h.b16 %v300
    %v465 = vunpack.c.l.b16 %v301
    %v466 = vunpack.c.h.b16 %v301
    %v467 = vunpack.c.l.b16 %v302
    %v468 = vunpack.c.h.b16 %v302
    %v469 = vunpack.c.l.b16 %v303
    %v470 = vunpack.c.h.b16 %v303
    %v471 = vunpack.c.l.b16 %v304
    %v472 = vunpack.c.h.b16 %v304
    %v473 = vunpack.c.l.b16 %v305
    %v474 = vunpack.c.h.b16 %v305
    %v475 = vunpack.c.l.b16 %v306
    %v476 = vunpack.c.h.b16 %v306
    %v477 = vunpack.c.l.b16 %v307
    %v478 = vunpack.c.h.b16 %v307
    %v479 = vunpack.c.l.b16 %v308
    %v480 = vunpack.c.h.b16 %v308
    %v481 = vunpack.c.l.b16 %v309
    %v482 = vunpack.c.h.b16 %v309
    %v483 = vunpack.c.l.b16 %v310
    %v484 = vunpack.c.h.b16 %v310
    %v485 = vunpack.c.l.b16 %v311
    %v486 = vunpack.c.h.b16 %v311
    %v487 = vunpack.c.l.b16 %v312
    %v488 = vunpack.c.h.b16 %v312
    %v489 = vunpack.c.l.b16 %v313
    %v490 = vunpack.c.h.b16 %v313
    %v491 = vunpack.c.l.b16 %v314
    %v492 = vunpack.c.h.b16 %v314
    %v493 = vunpack.c.l.b16 %v315
    %v494 = vunpack.c.h.b16 %v315
    %v495 = vunpack.c.l.b16 %v316
    %v496 = vunpack.c.h.b16 %v316
    %v497 = vunpack.c.l.b16 %v317
    %v498 = vunpack.c.h.b16 %v317
    %v499 = vunpack.c.l.b16 %v318
    %v500 = vunpack.c.h.b16 %v318
    %v501 = vunpack.c.l.b16 %v319
    %v502 = vunpack.c.h.b16 %v319
    %v503 = vunpack.c.l.b16 %v320
    %v504 = vunpack.c.h.b16 %v320
    %v505 = vunpack.c.l.b16 %v321
    %v506 = vunpack.c.h.b16 %v321
    %v507 = vunpack.c.l.b16 %v322
    %v508 = vunpack.c.h.b16 %v322
    %v509 = vunpack.c.l.b16 %v323
    %v510 = vunpack.c.h.b16 %v323
    %v511 = vunpack.c.l.b16 %v324
    %v512 = vunpack.c.h.b16 %v324
    %v513 = vunpack.c.l.b16 %v325
    %v514 = vunpack.c.h.b16 %v325
    %v515 = vunpack.c.l.b16 %v326
    %v516 = vunpack.c.h.b16 %v326
    %v517 = vunpack.c.l.b16 %v327
    %v518 = vunpack.c.h.b16 %v327
    %v519 = vunpack.c.l.b16 %v328
    %v520 = vunpack.c.h.b16 %v328
    %v521 = vunpack.c.l.b16 %v329
    %v522 = vunpack.c.h.b16 %v329
    %v523 = vunpack.c.l.b16 %v330
    %v524 = vunpack.c.h.b16 %v330
    %v525 = vunpack.c.l.b16 %v331
    %v526 = vunpack.c.h.b16 %v331
    %v527 = vunpack.c.l.b16 %v332
    %v528 = vunpack.c.h.b16 %v332
    %v529 = vunpack.c.l.b16 %v333
    %v530 = vunpack.c.h.b16 %v333
    %v531 = vunpack.c.l.b16 %v334
    %v532 = vunpack.c.h.b16 %v334
    %v533 = vunpack.c.l.b16 %v335
    %v534 = vunpack.c.h.b16 %v335
    %v535 = vunpack.c.l.b16 %v336
    %v536 = vunpack.c.h.b16 %v336
    %v537 = vunpack.c.l.b16 %v337
    %v538 = vunpack.c.h.b16 %v337
    %v539 = vunpack.c.l.b16 %v338
    %v540 = vunpack.c.h.b16 %v338
    %v541 = vunpack.c.l.b16 %v339
    %v542 = vunpack.c.h.b16 %v339
    %v543 = vunpack.c.l.b16 %v340
    %v544 = vunpack.c.h.b16 %v340
    %v545 = vpack.c.b16 %v419, %v417
    %v546 = vpack.c.b16 %v420, %v418
    %v547 = vpack.c.b16 %v423, %v421
    %v548 = vpack.c.b16 %v424, %v422
    %v549 = vpack.c.b16 %v427, %v425
    %v550 = vpack.c.b16 %v428, %v426
    %v551 = vpack.c.b16 %v431, %v429
    %v552 = vpack.c.b16 %v432, %v430
    %v553 = vpack.c.b16 %v435, %v433
    %v554 = vpack.c.b16 %v436, %v434
    %v555 = vpack.c.b16 %v439, %v437
    %v556 = vpack.c.b16 %v440, %v438
    %v557 = vpack.c.b16 %v443, %v441
    %v558 = vpack.c.b16 %v444, %v442
    %v559 = vpack.c.b16 %v447, %v445
    %v560 = vpack.c.b16 %v448, %v446
    %v561 = vpack.c.b16 %v451, %v449
    %v562 = vpack.c.b16 %v452, %v450
    %v563 = vpack.c.b16 %v455, %v453
    %v564 = vpack.c.b16 %v456, %v454
    %v565 = vpack.c.b16 %v459, %v457
    %v566 = vpack.c.b16 %v460, %v458
    %v567 = vpack.c.b16 %v463, %v461
    %v568 = vpack.c.b16 %v464, %v462
    %v569 = vpack.c.b16 %v467, %v465
    %v570 = vpack.c.b16 %v468, %v466
    %v571 = vpack.c.b16 %v471, %v469
    %v572 = vpack.c.b16 %v472, %v470
    %v573 = vpack.c.b16 %v475, %v473
    %v574 = vpack.c.b16 %v476, %v474
    %v575 = vpack.c.b16 %v479, %v477
    %v576 = vpack.c.b16 %v480, %v478
    %v577 = vpack.c.b16 %v483, %v481
    %v578 = vpack.c.b16 %v484, %v482
    %v579 = vpack.c.b16 %v487, %v485
    %v580 = vpack.c.b16 %v488, %v486
    %v581 = vpack.c.b16 %v491, %v489
    %v582 = vpack.c.b16 %v492, %v490
    %v583 = vpack.c.b16 %v495, %v493
    %v584 = vpack.c.b16 %v496, %v494
    %v585 = vpack.c.b16 %v499, %v497
    %v586 = vpack.c.b16 %v500, %v498
    %v587 = vpack.c.b16 %v503, %v501
    %v588 = vpack.c.b16 %v504, %v502
    %v589 = vpack.c.b16 %v507, %v505
    %v590 = vpack.c.b16 %v508, %v506
    %v591 = vpack.c.b16 %v511, %v509
    %v592 = vpack.c.b16 %v512, %v510
    %v593 = vpack.c.b16 %v515, %v513
    %v594 = vpack.c.b16 %v516, %v514
    %v595 = vpack.c.b16 %v519, %v517
    %v596 = vpack.c.b16 %v520, %v518
    %v597 = vpack.c.b16 %v523, %v521
    %v598 = vpack.c.b16 %v524, %v522
    %v599 = vpack.c.b16 %v527, %v525
    %v600 = vpack.c.b16 %v528, %v526
    %v601 = vpack.c.b16 %v531, %v529
    %v602 = vpack.c.b16 %v532, %v530
    %v603 = vpack.c.b16 %v535, %v533
    %v604 = vpack.c.b16 %v536, %v534
    %v605 = vpack.c.b16 %v539, %v537
    %v606 = vpack.c.b16 %v540, %v538
    %v607 = vpack.c.b16 %v543, %v541
    %v608 = vpack.c.b16 %v544, %v542
    %673 = vmatprep.subr.bf16.mxu0 %v546
    %674 = vmatpush1.bf16.msra.mxu0 %v545
    %675 = vmatprep.subr.bf16.mxu0 %v548
    %676 = vmatpush1.bf16.msra.mxu0 %v547
    %677 = vmatprep.subr.bf16.mxu0 %v550
    %678 = vmatpush1.bf16.msra.mxu0 %v549
    %679 = vmatprep.subr.bf16.mxu0 %v552
    %680 = vmatpush1.bf16.msra.mxu0 %v551
    %681 = vmatprep.subr.bf16.mxu0 %v554
    %682 = vmatpush1.bf16.msra.mxu0 %v553
    %683 = vmatprep.subr.bf16.mxu0 %v556
    %684 = vmatpush1.bf16.msra.mxu0 %v555
    %685 = vmatprep.subr.bf16.mxu0 %v558
    %686 = vmatpush1.bf16.msra.mxu0 %v557
    %687 = vmatprep.subr.bf16.mxu0 %v560
    %688 = vmatpush1.bf16.msra.mxu0 %v559
    %689 = vmatprep.subr.bf16.mxu0 %v562
    %690 = vmatpush1.bf16.msra.mxu0 %v561
    %691 = vmatprep.subr.bf16.mxu0 %v564
    %692 = vmatpush1.bf16.msra.mxu0 %v563
    %693 = vmatprep.subr.bf16.mxu0 %v566
    %694 = vmatpush1.bf16.msra.mxu0 %v565
    %695 = vmatprep.subr.bf16.mxu0 %v568
    %696 = vmatpush1.bf16.msra.mxu0 %v567
    %697 = vmatprep.subr.bf16.mxu0 %v570
    %698 = vmatpush1.bf16.msra.mxu0 %v569
    %699 = vmatprep.subr.bf16.mxu0 %v572
    %700 = vmatpush1.bf16.msra.mxu0 %v571
    %701 = vmatprep.subr.bf16.mxu0 %v574
    %702 = vmatpush1.bf16.msra.mxu0 %v573
    %703 = vmatprep.subr.bf16.mxu0 %v576
    %704 = vmatpush1.bf16.msra.mxu0 %v575
    %705 = vmatprep.mubr.bf16.mxu0 %v274
    %706 = vmatmul.mubr.bf16.gmra.mrb[0].mxu0 %v273
    %v707 = vpop.f32.mrb[0].mxu0
    %v708 = vadd.f32 %v346, %v707
    %v709 = vpop.f32.mrb[0].mxu0
    %v710 = vadd.f32 %v350, %v709
    %v711 = vpop.f32.mrb[0].mxu0
    %v712 = vadd.f32 %v346, %v711
    %v713 = vpop.f32.mrb[0].mxu0
    %v714 = vadd.f32 %v350, %v713
    %715 = vdwg.mxu0
    %716 = vmatprep.subr.bf16.mxu0 %v578
    %717 = vmatpush1.bf16.msra.mxu0 %v577
    %718 = vmatprep.subr.bf16.mxu0 %v580
    %719 = vmatpush1.bf16.msra.mxu0 %v579
    %720 = vmatprep.subr.bf16.mxu0 %v582
    %721 = vmatpush1.bf16.msra.mxu0 %v581
    %722 = vmatprep.subr.bf16.mxu0 %v584
    %723 = vmatpush1.bf16.msra.mxu0 %v583
    %724 = vmatprep.subr.bf16.mxu0 %v586
    %725 = vmatpush1.bf16.msra.mxu0 %v585
    %726 = vmatprep.subr.bf16.mxu0 %v588
    %727 = vmatpush1.bf16.msra.mxu0 %v587
    %728 = vmatprep.subr.bf16.mxu0 %v590
    %729 = vmatpush1.bf16.msra.mxu0 %v589
    %730 = vmatprep.subr.bf16.mxu0 %v592
    %731 = vmatpush1.bf16.msra.mxu0 %v591
    %732 = vmatprep.subr.bf16.mxu0 %v594
    %733 = vmatpush1.bf16.msra.mxu0 %v593
    %734 = vmatprep.subr.bf16.mxu0 %v596
    %735 = vmatpush1.bf16.msra.mxu0 %v595
    %736 = vmatprep.subr.bf16.mxu0 %v598
    %737 = vmatpush1.bf16.msra.mxu0 %v597
    %738 = vmatprep.subr.bf16.mxu0 %v600
    %739 = vmatpush1.bf16.msra.mxu0 %v599
    %740 = vmatprep.subr.bf16.mxu0 %v602
    %741 = vmatpush1.bf16.msra.mxu0 %v601
    %742 = vmatprep.subr.bf16.mxu0 %v604
    %743 = vmatpush1.bf16.msra.mxu0 %v603
    %744 = vmatprep.subr.bf16.mxu0 %v606
    %745 = vmatpush1.bf16.msra.mxu0 %v605
    %746 = vmatprep.subr.bf16.mxu0 %v608
    %747 = vmatpush1.bf16.msra.mxu0 %v607
    %748 = vmatprep.mubr.bf16.mxu0 %v276
    %749 = vmatmul.mubr.bf16.gmra.mrb[0].mxu0 %v275
    %v750 = vpop.f32.mrb[0].mxu0
    %v751 = vadd.f32 %v708, %v750
    %v752 = vpop.f32.mrb[0].mxu0
    %v753 = vadd.f32 %v710, %v752
    %v754 = vpop.f32.mrb[0].mxu0
    %v755 = vadd.f32 %v712, %v754
    %v756 = vpop.f32.mrb[0].mxu0
    %v757 = vadd.f32 %v714, %v756
    %758 = vdwg.mxu0
    %v759 = vmax.f32 %v751, 0.0
    %v760 = vmax.f32 %v753, 0.0
    %v761 = vmax.f32 %v755, 0.0
    %v762 = vmax.f32 %v757, 0.0
    %v763 = vpack.c.bf16 %v761, %v759
    %v764 = vpack.c.bf16 %v762, %v760
    %v765 = vld [vmem:[#allocation8] sm:$0xff]
    %v766 = vld [vmem:[#allocation8 + $0x8] sm:$0xff]
    %v767 = vld [vmem:[#allocation8 + $0x10] sm:$0xff]
    %v768 = vld [vmem:[#allocation8 + $0x18] sm:$0xff]
    %v769 = vld [vmem:[#allocation8 + $0x20] sm:$0xff]
    %v770 = vld [vmem:[#allocation8 + $0x28] sm:$0xff]
    %v771 = vld [vmem:[#allocation8 + $0x30] sm:$0xff]
    %v772 = vld [vmem:[#allocation8 + $0x38] sm:$0xff]
    %v773 = vld [vmem:[#allocation8 + $0x40] sm:$0xff]
    %v774 = vld [vmem:[#allocation8 + $0x48] sm:$0xff]
    %v775 = vld [vmem:[#allocation8 + $0x50] sm:$0xff]
    %v776 = vld [vmem:[#allocation8 + $0x58] sm:$0xff]
    %v777 = vld [vmem:[#allocation8 + $0x60] sm:$0xff]
    %v778 = vld [vmem:[#allocation8 + $0x68] sm:$0xff]
    %v779 = vld [vmem:[#allocation8 + $0x70] sm:$0xff]
    %v780 = vld [vmem:[#allocation8 + $0x78] sm:$0xff]
    %v781 = vld [vmem:[#allocation8 + $0x80] sm:$0xff]
    %v782 = vld [vmem:[#allocation8 + $0x88] sm:$0xff]
    %v783 = vld [vmem:[#allocation8 + $0x90] sm:$0xff]
    %v784 = vld [vmem:[#allocation8 + $0x98] sm:$0xff]
    %v785 = vld [vmem:[#allocation8 + $0xa0] sm:$0xff]
    %v786 = vld [vmem:[#allocation8 + $0xa8] sm:$0xff]
    %v787 = vld [vmem:[#allocation8 + $0xb0] sm:$0xff]
    %v788 = vld [vmem:[#allocation8 + $0xb8] sm:$0xff]
    %v789 = vld [vmem:[#allocation8 + $0xc0] sm:$0xff]
    %v790 = vld [vmem:[#allocation8 + $0xc8] sm:$0xff]
    %v791 = vld [vmem:[#allocation8 + $0xd0] sm:$0xff]
    %v792 = vld [vmem:[#allocation8 + $0xd8] sm:$0xff]
    %v793 = vld [vmem:[#allocation8 + $0xe0] sm:$0xff]
    %v794 = vld [vmem:[#allocation8 + $0xe8] sm:$0xff]
    %v795 = vld [vmem:[#allocation8 + $0xf0] sm:$0xff]
    %v796 = vld [vmem:[#allocation8 + $0xf8] sm:$0xff]
    %v797 = vld [vmem:[%s6] sm:$0x3]
    %v799 = vlaneseq
    %v800 = vshrl.u32 %v799, 7
    %v801 = vsub.s32 0, %v800
    %v802 = vrot.slane %v797, %v801
    %v803 = vlaneseq
    %v804 = vshrl.u32 %v803, 7
    %v805 = vsub.s32 1, %v804
    %v806 = vrot.slane %v797, %v805
    %v841 = vunpack.c.l.b16 %v765
    %v842 = vunpack.c.h.b16 %v765
    %v843 = vunpack.c.l.b16 %v766
    %v844 = vunpack.c.h.b16 %v766
    %v845 = vunpack.c.l.b16 %v767
    %v846 = vunpack.c.h.b16 %v767
    %v847 = vunpack.c.l.b16 %v768
    %v848 = vunpack.c.h.b16 %v768
    %v849 = vunpack.c.l.b16 %v769
    %v850 = vunpack.c.h.b16 %v769
    %v851 = vunpack.c.l.b16 %v770
    %v852 = vunpack.c.h.b16 %v770
    %v853 = vunpack.c.l.b16 %v771
    %v854 = vunpack.c.h.b16 %v771
    %v855 = vunpack.c.l.b16 %v772
    %v856 = vunpack.c.h.b16 %v772
    %v857 = vunpack.c.l.b16 %v773
    %v858 = vunpack.c.h.b16 %v773
    %v859 = vunpack.c.l.b16 %v774
    %v860 = vunpack.c.h.b16 %v774
    %v861 = vunpack.c.l.b16 %v775
    %v862 = vunpack.c.h.b16 %v775
    %v863 = vunpack.c.l.b16 %v776
    %v864 = vunpack.c.h.b16 %v776
    %v865 = vunpack.c.l.b16 %v777
    %v866 = vunpack.c.h.b16 %v777
    %v867 = vunpack.c.l.b16 %v778
    %v868 = vunpack.c.h.b16 %v778
    %v869 = vunpack.c.l.b16 %v779
    %v870 = vunpack.c.h.b16 %v779
    %v871 = vunpack.c.l.b16 %v780
    %v872 = vunpack.c.h.b16 %v780
    %v873 = vunpack.c.l.b16 %v781
    %v874 = vunpack.c.h.b16 %v781
    %v875 = vunpack.c.l.b16 %v782
    %v876 = vunpack.c.h.b16 %v782
    %v877 = vunpack.c.l.b16 %v783
    %v878 = vunpack.c.h.b16 %v783
    %v879 = vunpack.c.l.b16 %v784
    %v880 = vunpack.c.h.b16 %v784
    %v881 = vunpack.c.l.b16 %v785
    %v882 = vunpack.c.h.b16 %v785
    %v883 = vunpack.c.l.b16 %v786
    %v884 = vunpack.c.h.b16 %v786
    %v885 = vunpack.c.l.b16 %v787
    %v886 = vunpack.c.h.b16 %v787
    %v887 = vunpack.c.l.b16 %v788
    %v888 = vunpack.c.h.b16 %v788
    %v889 = vunpack.c.l.b16 %v789
    %v890 = vunpack.c.h.b16 %v789
    %v891 = vunpack.c.l.b16 %v790
    %v892 = vunpack.c.h.b16 %v790
    %v893 = vunpack.c.l.b16 %v791
    %v894 = vunpack.c.h.b16 %v791
    %v895 = vunpack.c.l.b16 %v792
    %v896 = vunpack.c.h.b16 %v792
    %v897 = vunpack.c.l.b16 %v793
    %v898 = vunpack.c.h.b16 %v793
    %v899 = vunpack.c.l.b16 %v794
    %v900 = vunpack.c.h.b16 %v794
    %v901 = vunpack.c.l.b16 %v795
    %v902 = vunpack.c.h.b16 %v795
    %v903 = vunpack.c.l.b16 %v796
    %v904 = vunpack.c.h.b16 %v796
    %v905 = vpack.c.b16 %v843, %v841
    %v906 = vpack.c.b16 %v844, %v842
    %v907 = vpack.c.b16 %v847, %v845
    %v908 = vpack.c.b16 %v848, %v846
    %v909 = vpack.c.b16 %v851, %v849
    %v910 = vpack.c.b16 %v852, %v850
    %v911 = vpack.c.b16 %v855, %v853
    %v912 = vpack.c.b16 %v856, %v854
    %v913 = vpack.c.b16 %v859, %v857
    %v914 = vpack.c.b16 %v860, %v858
    %v915 = vpack.c.b16 %v863, %v861
    %v916 = vpack.c.b16 %v864, %v862
    %v917 = vpack.c.b16 %v867, %v865
    %v918 = vpack.c.b16 %v868, %v866
    %v919 = vpack.c.b16 %v871, %v869
    %v920 = vpack.c.b16 %v872, %v870
    %v921 = vpack.c.b16 %v875, %v873
    %v922 = vpack.c.b16 %v876, %v874
    %v923 = vpack.c.b16 %v879, %v877
    %v924 = vpack.c.b16 %v880, %v878
    %v925 = vpack.c.b16 %v883, %v881
    %v926 = vpack.c.b16 %v884, %v882
    %v927 = vpack.c.b16 %v887, %v885
    %v928 = vpack.c.b16 %v888, %v886
    %v929 = vpack.c.b16 %v891, %v889
    %v930 = vpack.c.b16 %v892, %v890
    %v931 = vpack.c.b16 %v895, %v893
    %v932 = vpack.c.b16 %v896, %v894
    %v933 = vpack.c.b16 %v899, %v897
    %v934 = vpack.c.b16 %v900, %v898
    %v935 = vpack.c.b16 %v903, %v901
    %v936 = vpack.c.b16 %v904, %v902
    %969 = vmatprep.subr.bf16.mxu0 %v906
    %970 = vmatpush1.bf16.msra.mxu0 %v905
    %971 = vmatprep.subr.bf16.mxu0 %v908
    %972 = vmatpush1.bf16.msra.mxu0 %v907
    %973 = vmatprep.subr.bf16.mxu0 %v910
    %974 = vmatpush1.bf16.msra.mxu0 %v909
    %975 = vmatprep.subr.bf16.mxu0 %v912
    %976 = vmatpush1.bf16.msra.mxu0 %v911
    %977 = vmatprep.subr.bf16.mxu0 %v914
    %978 = vmatpush1.bf16.msra.mxu0 %v913
    %979 = vmatprep.subr.bf16.mxu0 %v916
    %980 = vmatpush1.bf16.msra.mxu0 %v915
    %981 = vmatprep.subr.bf16.mxu0 %v918
    %982 = vmatpush1.bf16.msra.mxu0 %v917
    %983 = vmatprep.subr.bf16.mxu0 %v920
    %984 = vmatpush1.bf16.msra.mxu0 %v919
    %985 = vmatprep.subr.bf16.mxu0 %v922
    %986 = vmatpush1.bf16.msra.mxu0 %v921
    %987 = vmatprep.subr.bf16.mxu0 %v924
    %988 = vmatpush1.bf16.msra.mxu0 %v923
    %989 = vmatprep.subr.bf16.mxu0 %v926
    %990 = vmatpush1.bf16.msra.mxu0 %v925
    %991 = vmatprep.subr.bf16.mxu0 %v928
    %992 = vmatpush1.bf16.msra.mxu0 %v927
    %993 = vmatprep.subr.bf16.mxu0 %v930
    %994 = vmatpush1.bf16.msra.mxu0 %v929
    %995 = vmatprep.subr.bf16.mxu0 %v932
    %996 = vmatpush1.bf16.msra.mxu0 %v931
    %997 = vmatprep.subr.bf16.mxu0 %v934
    %998 = vmatpush1.bf16.msra.mxu0 %v933
    %999 = vmatprep.subr.bf16.mxu0 %v936
    %1000 = vmatpush1.bf16.msra.mxu0 %v935
    %1001 = vmatprep.mubr.bf16.mxu0 %v764
    %1002 = vmatmul.mubr.bf16.gmra.mrb[0].mxu0 %v763
    %v1003 = vpop.f32.mrb[0].mxu0
    %v1004 = vadd.f32 %v802, %v1003
    %v1005 = vpop.f32.mrb[0].mxu0
    %v1006 = vadd.f32 %v806, %v1005
    %v1007 = vpop.f32.mrb[0].mxu0
    %v1008 = vadd.f32 %v802, %v1007
    %v1009 = vpop.f32.mrb[0].mxu0
    %v1010 = vadd.f32 %v806, %v1009
    %1011 = vdwg.mxu0
    %v1012 = vmax.f32 %v1004, 0.0
    %v1013 = vmax.f32 %v1006, 0.0
    %v1014 = vmax.f32 %v1008, 0.0
    %v1015 = vmax.f32 %v1010, 0.0
    %v1016 = vpack.c.bf16 %v1014, %v1012
    %v1017 = vpack.c.bf16 %v1015, %v1013
    %v1018 = vld [vmem:[#allocation10] sm:$0xf]
    %v1019 = vld [vmem:[#allocation10 + $0x4] sm:$0xf]
    %v1020 = vld [vmem:[#allocation10 + $0x8] sm:$0xf]
    %v1021 = vld [vmem:[#allocation10 + $0xc] sm:$0xf]
    %v1022 = vld [vmem:[#allocation10 + $0x10] sm:$0xf]
    %v1023 = vld [vmem:[#allocation10 + $0x14] sm:$0xf]
    %v1024 = vld [vmem:[#allocation10 + $0x18] sm:$0xf]
    %v1025 = vld [vmem:[#allocation10 + $0x1c] sm:$0xf]
    %v1026 = vld [vmem:[#allocation10 + $0x20] sm:$0xf]
    %v1027 = vld [vmem:[#allocation10 + $0x24] sm:$0xf]
    %v1028 = vld [vmem:[#allocation10 + $0x28] sm:$0xf]
    %v1029 = vld [vmem:[#allocation10 + $0x2c] sm:$0xf]
    %v1030 = vld [vmem:[#allocation10 + $0x30] sm:$0xf]
    %v1031 = vld [vmem:[#allocation10 + $0x34] sm:$0xf]
    %v1032 = vld [vmem:[#allocation10 + $0x38] sm:$0xf]
    %v1033 = vld [vmem:[#allocation10 + $0x3c] sm:$0xf]
    %v1034 = vld [vmem:[#allocation10 + $0x40] sm:$0xf]
    %v1035 = vld [vmem:[#allocation10 + $0x44] sm:$0xf]
    %v1036 = vld [vmem:[#allocation10 + $0x48] sm:$0xf]
    %v1037 = vld [vmem:[#allocation10 + $0x4c] sm:$0xf]
    %v1038 = vld [vmem:[#allocation10 + $0x50] sm:$0xf]
    %v1039 = vld [vmem:[#allocation10 + $0x54] sm:$0xf]
    %v1040 = vld [vmem:[#allocation10 + $0x58] sm:$0xf]
    %v1041 = vld [vmem:[#allocation10 + $0x5c] sm:$0xf]
    %v1042 = vld [vmem:[#allocation10 + $0x60] sm:$0xf]
    %v1043 = vld [vmem:[#allocation10 + $0x64] sm:$0xf]
    %v1044 = vld [vmem:[#allocation10 + $0x68] sm:$0xf]
    %v1045 = vld [vmem:[#allocation10 + $0x6c] sm:$0xf]
    %v1046 = vld [vmem:[#allocation10 + $0x70] sm:$0xf]
    %v1047 = vld [vmem:[#allocation10 + $0x74] sm:$0xf]
    %v1048 = vld [vmem:[#allocation10 + $0x78] sm:$0xf]
    %v1049 = vld [vmem:[#allocation10 + $0x7c] sm:$0xf]
    %v1050 = vld [vmem:[%s8] sm:$0x1]
    %v1052 = vlaneseq
    %v1053 = vshrl.u32 %v1052, 7
    %v1054 = vsub.s32 0, %v1053
    %v1055 = vrot.slane %v1050, %v1054
    %v1089 = vunpack.c.l.b16 %v1018
    %v1090 = vunpack.c.l.b16 %v1019
    %v1091 = vunpack.c.l.b16 %v1020
    %v1092 = vunpack.c.l.b16 %v1021
    %v1093 = vunpack.c.l.b16 %v1022
    %v1094 = vunpack.c.l.b16 %v1023
    %v1095 = vunpack.c.l.b16 %v1024
    %v1096 = vunpack.c.l.b16 %v1025
    %v1097 = vunpack.c.l.b16 %v1026
    %v1098 = vunpack.c.l.b16 %v1027
    %v1099 = vunpack.c.l.b16 %v1028
    %v1100 = vunpack.c.l.b16 %v1029
    %v1101 = vunpack.c.l.b16 %v1030
    %v1102 = vunpack.c.l.b16 %v1031
    %v1103 = vunpack.c.l.b16 %v1032
    %v1104 = vunpack.c.l.b16 %v1033
    %v1105 = vunpack.c.l.b16 %v1034
    %v1106 = vunpack.c.l.b16 %v1035
    %v1107 = vunpack.c.l.b16 %v1036
    %v1108 = vunpack.c.l.b16 %v1037
    %v1109 = vunpack.c.l.b16 %v1038
    %v1110 = vunpack.c.l.b16 %v1039
    %v1111 = vunpack.c.l.b16 %v1040
    %v1112 = vunpack.c.l.b16 %v1041
    %v1113 = vunpack.c.l.b16 %v1042
    %v1114 = vunpack.c.l.b16 %v1043
    %v1115 = vunpack.c.l.b16 %v1044
    %v1116 = vunpack.c.l.b16 %v1045
    %v1117 = vunpack.c.l.b16 %v1046
    %v1118 = vunpack.c.l.b16 %v1047
    %v1119 = vunpack.c.l.b16 %v1048
    %v1120 = vunpack.c.l.b16 %v1049
    %v1121 = vpack.c.b16 %v1090, %v1089
    %v1122 = vpack.c.b16 %v1092, %v1091
    %v1123 = vpack.c.b16 %v1094, %v1093
    %v1124 = vpack.c.b16 %v1096, %v1095
    %v1125 = vpack.c.b16 %v1098, %v1097
    %v1126 = vpack.c.b16 %v1100, %v1099
    %v1127 = vpack.c.b16 %v1102, %v1101
    %v1128 = vpack.c.b16 %v1104, %v1103
    %v1129 = vpack.c.b16 %v1106, %v1105
    %v1130 = vpack.c.b16 %v1108, %v1107
    %v1131 = vpack.c.b16 %v1110, %v1109
    %v1132 = vpack.c.b16 %v1112, %v1111
    %v1133 = vpack.c.b16 %v1114, %v1113
    %v1134 = vpack.c.b16 %v1116, %v1115
    %v1135 = vpack.c.b16 %v1118, %v1117
    %v1136 = vpack.c.b16 %v1120, %v1119
    %1153 = vmatprep.subr.bf16.mxu0 0
    %1154 = vmatpush1.bf16.msra.mxu0 %v1121
    %1155 = vmatprep.subr.bf16.mxu0 0
    %1156 = vmatpush1.bf16.msra.mxu0 %v1122
    %1157 = vmatprep.subr.bf16.mxu0 0
    %1158 = vmatpush1.bf16.msra.mxu0 %v1123
    %1159 = vmatprep.subr.bf16.mxu0 0
    %1160 = vmatpush1.bf16.msra.mxu0 %v1124
    %1161 = vmatprep.subr.bf16.mxu0 0
    %1162 = vmatpush1.bf16.msra.mxu0 %v1125
    %1163 = vmatprep.subr.bf16.mxu0 0
    %1164 = vmatpush1.bf16.msra.mxu0 %v1126
    %1165 = vmatprep.subr.bf16.mxu0 0
    %1166 = vmatpush1.bf16.msra.mxu0 %v1127
    %1167 = vmatprep.subr.bf16.mxu0 0
    %1168 = vmatpush1.bf16.msra.mxu0 %v1128
    %1169 = vmatprep.subr.bf16.mxu0 0
    %1170 = vmatpush1.bf16.msra.mxu0 %v1129
    %1171 = vmatprep.subr.bf16.mxu0 0
    %1172 = vmatpush1.bf16.msra.mxu0 %v1130
    %1173 = vmatprep.subr.bf16.mxu0 0
    %1174 = vmatpush1.bf16.msra.mxu0 %v1131
    %1175 = vmatprep.subr.bf16.mxu0 0
    %1176 = vmatpush1.bf16.msra.mxu0 %v1132
    %1177 = vmatprep.subr.bf16.mxu0 0
    %1178 = vmatpush1.bf16.msra.mxu0 %v1133
    %1179 = vmatprep.subr.bf16.mxu0 0
    %1180 = vmatpush1.bf16.msra.mxu0 %v1134
    %1181 = vmatprep.subr.bf16.mxu0 0
    %1182 = vmatpush1.bf16.msra.mxu0 %v1135
    %1183 = vmatprep.subr.bf16.mxu0 0
    %1184 = vmatpush1.bf16.msra.mxu0 %v1136
    %1185 = vmatprep.mubr.bf16.mxu0 %v1017
    %1186 = vmatmul.mubr.bf16.gmra.mrb[0].mxu0 %v1016
    %v1187 = vpop.f32.mrb[0].mxu0
    %v1188 = vadd.f32 %v1055, %v1187
    %v1189 = vpop.f32.mrb[0].mxu0
    %v1190 = vpop.f32.mrb[0].mxu0
    %v1191 = vadd.f32 %v1055, %v1190
    %v1192 = vpop.f32.mrb[0].mxu0
    %1193 = vdwg.mxu0
    %v1194 = vlaneseq
    %v1195 = vand.u32 %v1194, 127
    %vm1196 = vcmp.lt.s32.totalorder %v1195, 4
    %v1197 = vsel %vm1196, %v1188, 0.0
    %v1198 = vsel %vm1196, %v1191, 0.0
    %1199 = vadd.xlane.f32.xlu0 %v1197
    %v1200 = vpop.xlane.xlu0 %1199
    %1201 = vadd.xlane.f32.xlu0 %v1198
    %v1202 = vpop.xlane.xlu0 %1201
    %v1203 = vmul.f32 %v1200, 0.25
    %v1204 = vmul.f32 %v1202, 0.25
    %vm1205 = vcmp.eq.s32.totalorder %v1195, 127
    %v1206 = vsel %vm1205, %v1188, 0.0
    %v1207 = vsel %vm1205, %v1191, 0.0
    %1208 = vadd.xlane.f32.xlu0 %v1206
    %v1209 = vpop.xlane.xlu0 %1208
    %1210 = vadd.xlane.f32.xlu0 %v1207
    %v1211 = vpop.xlane.xlu0 %1210
    %v1212 = vsub.f32 %v1188, %v1203
    %v1213 = vsub.f32 %v1191, %v1204
    %v1214 = vadd.f32 %v1209, %v1212
    %v1215 = vadd.f32 %v1211, %v1213
    %1216 = vst [vmem:[#allocation11] sm:$0xff] %v1214
    %1217 = vst [vmem:[#allocation11 + $0x8] sm:$0xff] %v1215
    // Predicated region
    $region58: #{tpu_custom_call.1} parent=1 // pred_check
      _
    $region59: #{tpu_custom_call.1} parent=1 // pred_check_branch
      %1219 = sbr.rel (0) target = $region61
    $region60: #{tpu_custom_call.1} parent=1 // pred_region
      %s1221 = ssub.s32 256, 256
      %1222 = vsyncadd [#allocation4], %s1221
      %s1223 = sshll.u32 [#allocation11], 4
      %s1224 = int_to_ptr.vmem [resolvable:$true] %s1223
      %1229 = dma.vmem_to_hbm [thread:$0]  %s1224, 256, %s9, [#allocation4], 128, 128, 8
    $region61: #{tpu_custom_call.1} parent=1 // pred_fallthru
      _
    // Predicated region
    $region62: #{tpu_custom_call.1} parent=1 // pred_check
      _
    $region63: #{tpu_custom_call.1} parent=1 // pred_check_branch
      %1231 = sbr.rel (0) target = $region65
    $region64: #{tpu_custom_call.1} parent=1 // pred_region
      %1232 = dma.done [#allocation4], 256
    $region65: #{tpu_custom_call.1} parent=1 // pred_fallthru
      _
    %1233 = vsyncpa [#allocation3], 1
    %1234 = vsyncpa [#allocation6], 1
    %1235 = vsyncpa [#allocation9], 1
    %1236 = vsyncpa [#allocation4], 1

</llo_original>
